<compile_context>
chip_gen: v7x
topology: tpu7x:2x2x1
jax: 0.10.0
libtpu: 0.0.40
codegen_flags: <defaults>
</compile_context>

<pallas_src>
import jax
import jax.numpy as jnp
import numpy as np
from jax import lax
from jax.experimental import pallas as pl
from jax.experimental.pallas import tpu as pltpu

# ---- small, module-consistent sizes ----
BATCH = 8            # number of environments
OBS_DIM = 16         # obs_shape[0] = num_inputs
HIDDEN = 32          # hidden_size
NUM_ACTIONS = 6      # action_space.n (Discrete)

H2 = 2 * HIDDEN                  # 64  : packed [critic | actor] width
W_ROWS = OBS_DIM + H2 + H2       # 144 : rows of the packed weight slab
OUT_MAIN_W = 2 * H2              # 128 : [hc | ha | value,logits,pad...] lane-dense
OUT_AUX_W = 128                  # 128 : lanes 0=action 1=log_prob 2=entropy, rest 0
MAX_TILE = 512                   # max batch-tile rows


def _round_up(n, m):
    return ((n + m - 1) // m) * m


# --------------------------------------------------------------------------
# Fused Pallas kernel: 3 MXU matmuls, 2 tanh, fused act() epilogue,
# lane-dense output slabs.
# --------------------------------------------------------------------------
def ops_policy_kernel(x_ref, w_ref, b_ref, main_ref, aux_ref):
    tb = x_ref.shape[0]
    xb = x_ref[...].astype(jnp.bfloat16)                               # (TB, 16)

    # layer 1 (critic + actor fused):  x @ [Wc1 | Wa1]
    h1 = jnp.tanh(
        jnp.dot(xb, w_ref[0:OBS_DIM, :], preferred_element_type=jnp.float32)
        + b_ref[0:1, :])                                               # (TB, 64) f32

    # layer 2 (block-diagonal, keeps critic/actor independent)
    h2 = jnp.tanh(
        jnp.dot(h1.astype(jnp.bfloat16), w_ref[OBS_DIM:OBS_DIM + H2, :],
                preferred_element_type=jnp.float32)
        + b_ref[1:2, :])                                               # (TB, 64) = [hc | ha]

    # fused heads: full 64-lane padded weight (value lane 0, logits lanes 1..6)
    head = (jnp.dot(h2.astype(jnp.bfloat16),
                    w_ref[OBS_DIM + H2:W_ROWS, :],
                    preferred_element_type=jnp.float32)
            + b_ref[2:3, :])                                           # (TB, 64)

    # lane-dense 128-wide main slab: two 64-lane-aligned stores
    main_ref[:, 0:H2] = h2
    main_ref[:, H2:OUT_MAIN_W] = head

    # ---- fused act(deterministic=True) epilogue: mode / log_prob / entropy ----
    lane = lax.broadcasted_iota(jnp.int32, (tb, H2), 1)
    valid = (lane >= 1) & (lane < 1 + NUM_ACTIONS)
    masked = jnp.where(valid, head, jnp.float32(-1e30))
    m = jnp.max(masked, axis=-1, keepdims=True)                        # (TB, 1)
    e = jnp.where(valid, jnp.exp(jnp.where(valid, head - m, -30.0)), 0.0)
    s = jnp.sum(e, axis=-1, keepdims=True)                             # (TB, 1)
    log_s = jnp.log(s)

    # mode = first lane achieving the max (matches torch argmax tie-breaking)
    first_max = jnp.min(jnp.where(valid & (masked == m), lane, H2),
                        axis=-1, keepdims=True)                        # (TB, 1) int32
    action_f = (first_max - 1).astype(jnp.float32)

    # log_prob of the mode: logits[mode] - logsumexp = m - (m + log_s) = -log_s
    logp_action = -log_s

    # per-row entropy
    probs = e * (1.0 / s)
    logp_all = head - m - log_s
    ent = -jnp.sum(jnp.where(valid, probs * logp_all, 0.0),
                   axis=-1, keepdims=True)                             # (TB, 1)

    # lane-dense 128-wide aux slab: single unmasked store
    lane_aux = lax.broadcasted_iota(jnp.int32, (tb, OUT_AUX_W), 1)
    aux = (jnp.where(lane_aux == 0, action_f, 0.0)
           + jnp.where(lane_aux == 1, logp_action, 0.0)
           + jnp.where(lane_aux == 2, ent, 0.0))
    aux_ref[...] = aux


@jax.jit
def ops_policy_act(x, w_all, b_all):
    """Fused OpsPolicy.act(deterministic=True).
    Returns (value (B,1), action (B,1) int32, action_log_probs (B,1),
             dist_entropy (), hidden_actor (B,H), logits (B,A))."""
    B = x.shape[0]

    # Pad batch to a sublane-aligned, tile-divisible size (zero rows cost ~nothing).
    b8 = _round_up(B, 8)
    tb = min(MAX_TILE, _round_up(max(-(-b8 // 2), 8), 8))   # ~B/2 so grid>=2 on v7x
    b_pad = _round_up(b8, tb)
    if b_pad != B:
        x = jnp.pad(x, ((0, b_pad - B), (0, 0)))
    grid = (b_pad // tb,)

    out_main, out_aux = pl.pallas_call(
        ops_policy_kernel,
        out_shape=(jax.ShapeDtypeStruct((b_pad, OUT_MAIN_W), jnp.float32),
                   jax.ShapeDtypeStruct((b_pad, OUT_AUX_W), jnp.float32)),
        grid_spec=pltpu.PrefetchScalarGridSpec(
            num_scalar_prefetch=0,
            grid=grid,
            in_specs=[
                pl.BlockSpec((tb, OBS_DIM), lambda i: (i, 0)),     # activations stream
                pl.BlockSpec((W_ROWS, H2), lambda i: (0, 0)),      # weights resident
                pl.BlockSpec((3, H2), lambda i: (0, 0)),           # biases resident
            ],
            out_specs=[
                pl.BlockSpec((tb, OUT_MAIN_W), lambda i: (i, 0)),
                pl.BlockSpec((tb, OUT_AUX_W), lambda i: (i, 0)),
            ],
        ),
        compiler_params=pltpu.CompilerParams(
            dimension_semantics=("parallel",)),
    )(x, w_all, b_all)

    hidden_actor = out_main[:B, HIDDEN:H2]
    value = out_main[:B, H2:H2 + 1]
    logits = out_main[:B, H2 + 1:H2 + 1 + NUM_ACTIONS]
    action = out_aux[:B, 0:1].astype(jnp.int32)
    action_log_probs = out_aux[:B, 1:2]
    dist_entropy = jnp.mean(out_aux[:B, 2])
    return value, action, action_log_probs, dist_entropy, hidden_actor, logits


# --------------------------------------------------------------------------
# Deterministic parameter construction (orthogonal init, zero bias) + packing
# --------------------------------------------------------------------------
def orthogonal_linear(key, in_dim, out_dim, gain):
    """Mimics init_(nn.Linear(in,out)): orthogonal weight (gain), zero bias.
    Returns W of shape (in, out) (transposed for x @ W) and b of shape (out,)."""
    w_torch = jax.nn.initializers.orthogonal(scale=gain)(
        key, (out_dim, in_dim), jnp.float32)          # torch convention (out, in)
    return jnp.transpose(w_torch), jnp.zeros((out_dim,), jnp.float32)


def build_params(seed=0):
    keys = jax.random.split(jax.random.PRNGKey(seed), 6)
    g = float(np.sqrt(2.0))
    wc1, bc1 = orthogonal_linear(keys[0], OBS_DIM, HIDDEN, g)
    wc2, bc2 = orthogonal_linear(keys[1], HIDDEN, HIDDEN, g)
    wa1, ba1 = orthogonal_linear(keys[2], OBS_DIM, HIDDEN, g)
    wa2, ba2 = orthogonal_linear(keys[3], HIDDEN, HIDDEN, g)
    wcl, bcl = orthogonal_linear(keys[4], HIDDEN, 1, g)
    wd, bd = orthogonal_linear(keys[5], HIDDEN, NUM_ACTIONS, 0.01)   # dist head gain=0.01

    # layer-1 fused weight: (16, 64) = [Wc1 | Wa1]
    w1 = jnp.concatenate([wc1, wa1], axis=1)
    b1 = jnp.concatenate([bc1, ba1], axis=0)

    # layer-2 fused weight: (64, 64) block-diagonal
    w2 = jnp.zeros((H2, H2), jnp.float32)
    w2 = w2.at[:HIDDEN, :HIDDEN].set(wc2).at[HIDDEN:, HIDDEN:].set(wa2)
    b2 = jnp.concatenate([bc2, ba2], axis=0)

    # fused heads, 64 lanes: lane 0 = value, lanes 1..6 = logits, rest zero columns
    wh = jnp.zeros((H2, H2), jnp.float32)
    wh = wh.at[:HIDDEN, 0:1].set(wcl).at[HIDDEN:, 1:1 + NUM_ACTIONS].set(wd)
    bh = jnp.zeros((H2,), jnp.float32)
    bh = bh.at[0].set(bcl[0]).at[1:1 + NUM_ACTIONS].set(bd)

    # pack everything: one bf16 weight slab, one f32 bias slab
    w_all = jnp.concatenate([w1, w2, wh], axis=0).astype(jnp.bfloat16)   # (144, 64)
    b_all = jnp.stack([b1, b2, bh])                                      # (3, 64)

    raw = (wc1, bc1, wc2, bc2, wa1, ba1, wa2, ba2, wcl, bcl, wd, bd)
    return w_all, b_all, raw


# --------------------------------------------------------------------------
# References
# --------------------------------------------------------------------------
def reference_packed(x, w_all, b_all):
    """Same packed / bf16-rounded math as the kernel, in plain JAX (tight check)."""
    w = w_all.astype(jnp.float32)
    b = b_all
    xb = x.astype(jnp.bfloat16).astype(jnp.float32)
    h1 = jnp.tanh(xb @ w[:OBS_DIM] + b[0:1])
    h1b = h1.astype(jnp.bfloat16).astype(jnp.float32)
    h2 = jnp.tanh(h1b @ w[OBS_DIM:OBS_DIM + H2] + b[1:2])
    h2b = h2.astype(jnp.bfloat16).astype(jnp.float32)
    head = h2b @ w[OBS_DIM + H2:] + b[2:3]
    return head[:, 0:1], h2[:, HIDDEN:], head[:, 1:1 + NUM_ACTIONS]


def reference_module(x, raw):
    """Un-fused, full-f32 math matching the PyTorch module structure (loose check)."""
    (wc1, bc1, wc2, bc2, wa1, ba1, wa2, ba2, wcl, bcl, wd, bd) = raw
    hc = jnp.tanh(jnp.tanh(x @ wc1 + bc1) @ wc2 + bc2)
    ha = jnp.tanh(jnp.tanh(x @ wa1 + ba1) @ wa2 + ba2)
    return hc @ wcl + bcl, ha, ha @ wd + bd


if __name__ == "__main__":
    inputs = jax.random.normal(jax.random.PRNGKey(0), (BATCH, OBS_DIM), jnp.float32)
    rnn_hxs = jnp.zeros((BATCH, 1), jnp.float32)   # recurrent_hidden_state_size == 1
    masks = jnp.ones((BATCH, 1), jnp.float32)      # unused in this non-recurrent path

    w_all, b_all, raw = build_params(seed=0)

    (value, action, action_log_probs, dist_entropy,
     hidden_actor, logits) = ops_policy_act(inputs, w_all, b_all)
    jax.block_until_ready((value, action, action_log_probs, dist_entropy,
                           hidden_actor, logits, rnn_hxs))

    # tight check: kernel vs identical packed bf16 math
    v_p, ha_p, lg_p = reference_packed(inputs, w_all, b_all)
    np.testing.assert_allclose(np.asarray(value), np.asarray(v_p), atol=1e-2, rtol=1e-2)
    np.testing.assert_allclose(np.asarray(hidden_actor), np.asarray(ha_p), atol=1e-2, rtol=1e-2)
    np.testing.assert_allclose(np.asarray(logits), np.asarray(lg_p), atol=1e-2, rtol=1e-2)

    # loose check: kernel vs un-fused full-f32 module math (bf16 rounding only)
    v_m, ha_m, lg_m = reference_module(inputs, raw)
    np.testing.assert_allclose(np.asarray(value), np.asarray(v_m), atol=1e-1, rtol=1e-1)
    np.testing.assert_allclose(np.asarray(hidden_actor), np.asarray(ha_m), atol=1e-1, rtol=1e-1)
    np.testing.assert_allclose(np.asarray(logits), np.asarray(lg_m), atol=1e-1, rtol=1e-1)

    # fused act() epilogue self-consistency vs the kernel's own logits
    ref_action = np.argmax(np.asarray(logits), axis=-1)[:, None]
    ref_logp = jax.nn.log_softmax(logits, axis=-1)
    ref_alp = jnp.take_along_axis(ref_logp, jnp.asarray(ref_action), axis=-1)
    ref_ent = jnp.mean(-jnp.sum(jnp.exp(ref_logp) * ref_logp, axis=-1))
    np.testing.assert_array_equal(np.asarray(action), ref_action)
    np.testing.assert_allclose(np.asarray(action_log_probs), np.asarray(ref_alp),
                               atol=1e-3, rtol=1e-3)
    np.testing.assert_allclose(np.asarray(dist_entropy), np.asarray(ref_ent),
                               atol=1e-3, rtol=1e-3)

    print("KERNEL_OK")
</pallas_src>

<mosaic_0001>
module attributes {stable_mosaic.version = 11 : i64} {
  func.func @ops_policy_kernel(%arg0: i32, %arg1: memref<8x16xf32, #tpu.memory_space<vmem>>, %arg2: memref<144x64xbf16, #tpu.memory_space<vmem>>, %arg3: memref<3x64xf32, #tpu.memory_space<vmem>>, %arg4: memref<8x128xf32, #tpu.memory_space<vmem>>, %arg5: memref<8x128xf32, #tpu.memory_space<vmem>>) attributes {dimension_semantics = [#tpu.dimension_semantics<parallel>], iteration_bounds = array<i64: 1>, scalar_prefetch = 0 : i64, scratch_operands = 0 : i64, tpu.core_type = #tpu.core_type<tc>, window_params = [{transform_indices = @transform_0, window_bounds = array<i64: 8, 16>}, {pipeline_mode = #tpu.pipeline_mode<synchronous>, transform_indices = @transform_1, window_bounds = array<i64: 144, 64>}, {pipeline_mode = #tpu.pipeline_mode<synchronous>, transform_indices = @transform_2, window_bounds = array<i64: 3, 64>}, {transform_indices = @transform_3, window_bounds = array<i64: 8, 128>}, {transform_indices = @transform_4, window_bounds = array<i64: 8, 128>}]} {
    %c0 = arith.constant 0 : index
    %c0_0 = arith.constant 0 : index
    %0 = vector.load %arg1[%c0, %c0_0] : memref<8x16xf32, #tpu.memory_space<vmem>>, vector<8x16xf32>
    %1 = arith.truncf %0 : vector<8x16xf32> to vector<8x16xbf16>
    %c0_1 = arith.constant 0 : index
    %c0_2 = arith.constant 0 : index
    %2 = vector.load %arg2[%c0_1, %c0_2] : memref<144x64xbf16, #tpu.memory_space<vmem>>, vector<16x64xbf16>
    %cst = arith.constant dense<0.000000e+00> : vector<8x64xf32>
    %3 = tpu.matmul %1, %2, %cst {dimension_numbers = #tpu.dot_dimension_numbers<[1], [0], [0], [1], [0, 0, 1, 1], [], []>} : vector<8x16xbf16>, vector<16x64xbf16>, vector<8x64xf32> -> vector<8x64xf32>
    %c0_3 = arith.constant 0 : index
    %c0_4 = arith.constant 0 : index
    %4 = vector.load %arg3[%c0_3, %c0_4] : memref<3x64xf32, #tpu.memory_space<vmem>>, vector<1x64xf32>
    %5 = vector.broadcast %4 : vector<1x64xf32> to vector<8x64xf32>
    %6 = arith.addf %3, %5 : vector<8x64xf32>
    %7 = math.tanh %6 : vector<8x64xf32>
    %8 = arith.truncf %7 : vector<8x64xf32> to vector<8x64xbf16>
    %c16 = arith.constant 16 : index
    %c0_5 = arith.constant 0 : index
    %9 = vector.load %arg2[%c16, %c0_5] : memref<144x64xbf16, #tpu.memory_space<vmem>>, vector<64x64xbf16>
    %cst_6 = arith.constant dense<0.000000e+00> : vector<8x64xf32>
    %10 = tpu.matmul %8, %9, %cst_6 {dimension_numbers = #tpu.dot_dimension_numbers<[1], [0], [0], [1], [0, 0, 1, 1], [], []>} : vector<8x64xbf16>, vector<64x64xbf16>, vector<8x64xf32> -> vector<8x64xf32>
    %c1 = arith.constant 1 : index
    %c0_7 = arith.constant 0 : index
    %11 = vector.load %arg3[%c1, %c0_7] : memref<3x64xf32, #tpu.memory_space<vmem>>, vector<1x64xf32>
    %12 = vector.broadcast %11 : vector<1x64xf32> to vector<8x64xf32>
    %13 = arith.addf %10, %12 : vector<8x64xf32>
    %14 = math.tanh %13 : vector<8x64xf32>
    %15 = arith.truncf %14 : vector<8x64xf32> to vector<8x64xbf16>
    %c80 = arith.constant 80 : index
    %c0_8 = arith.constant 0 : index
    %16 = vector.load %arg2[%c80, %c0_8] : memref<144x64xbf16, #tpu.memory_space<vmem>>, vector<64x64xbf16>
    %cst_9 = arith.constant dense<0.000000e+00> : vector<8x64xf32>
    %17 = tpu.matmul %15, %16, %cst_9 {dimension_numbers = #tpu.dot_dimension_numbers<[1], [0], [0], [1], [0, 0, 1, 1], [], []>} : vector<8x64xbf16>, vector<64x64xbf16>, vector<8x64xf32> -> vector<8x64xf32>
    %c2 = arith.constant 2 : index
    %c0_10 = arith.constant 0 : index
    %18 = vector.load %arg3[%c2, %c0_10] : memref<3x64xf32, #tpu.memory_space<vmem>>, vector<1x64xf32>
    %19 = vector.broadcast %18 : vector<1x64xf32> to vector<8x64xf32>
    %20 = arith.addf %17, %19 : vector<8x64xf32>
    %c0_11 = arith.constant 0 : index
    %c0_12 = arith.constant 0 : index
    %21 = vector.load %arg4[%c0_11, %c0_12] : memref<8x128xf32, #tpu.memory_space<vmem>>, vector<8x64xf32>
    tpu.vector_store %arg4[%c0_11, %c0_12], %14 {strides = array<i32>} : memref<8x128xf32, #tpu.memory_space<vmem>>, vector<8x64xf32>,
    %c0_13 = arith.constant 0 : index
    %c64 = arith.constant 64 : index
    %22 = vector.load %arg4[%c0_13, %c64] : memref<8x128xf32, #tpu.memory_space<vmem>>, vector<8x64xf32>
    tpu.vector_store %arg4[%c0_13, %c64], %20 {strides = array<i32>} : memref<8x128xf32, #tpu.memory_space<vmem>>, vector<8x64xf32>,
    %23 = tpu.iota {dimensions = array<i32: 1>} : vector<8x64xi32>
    %c1_i32 = arith.constant 1 : i32
    %24 = vector.broadcast %c1_i32 : i32 to vector<8x64xi32>
    %25 = arith.cmpi sge, %23, %24 : vector<8x64xi32>
    %c7_i32 = arith.constant 7 : i32
    %26 = vector.broadcast %c7_i32 : i32 to vector<8x64xi32>
    %27 = arith.cmpi slt, %23, %26 : vector<8x64xi32>
    %28 = arith.andi %25, %27 : vector<8x64xi1>
    %cst_14 = arith.constant -1.000000e+30 : f32
    %29 = vector.broadcast %cst_14 : f32 to vector<8x64xf32>
    %30 = arith.select %28, %20, %29 : vector<8x64xi1>, vector<8x64xf32>
    %cst_15 = arith.constant dense<0xFF800000> : vector<8xf32>
    %31 = vector.multi_reduction <maximumf>, %30, %cst_15 [1] : vector<8x64xf32> to vector<8xf32>
    %32 = vector.shape_cast %31 : vector<8xf32> to vector<8x1xf32>
    %33 = vector.broadcast %32 : vector<8x1xf32> to vector<8x64xf32>
    %34 = arith.subf %20, %33 : vector<8x64xf32>
    %cst_16 = arith.constant -3.000000e+01 : f32
    %35 = vector.broadcast %cst_16 : f32 to vector<8x64xf32>
    %36 = arith.select %28, %34, %35 : vector<8x64xi1>, vector<8x64xf32>
    %37 = math.exp %36 : vector<8x64xf32>
    %cst_17 = arith.constant 0.000000e+00 : f32
    %38 = vector.broadcast %cst_17 : f32 to vector<8x64xf32>
    %39 = arith.select %28, %37, %38 : vector<8x64xi1>, vector<8x64xf32>
    %cst_18 = arith.constant dense<0.000000e+00> : vector<8xf32>
    %40 = vector.multi_reduction <add>, %39, %cst_18 [1] : vector<8x64xf32> to vector<8xf32>
    %41 = vector.shape_cast %40 : vector<8xf32> to vector<8x1xf32>
    %42 = math.log %41 : vector<8x1xf32>
    %43 = vector.broadcast %32 : vector<8x1xf32> to vector<8x64xf32>
    %44 = arith.cmpf oeq, %30, %43 : vector<8x64xf32>
    %45 = arith.andi %28, %44 : vector<8x64xi1>
    %c64_i32 = arith.constant 64 : i32
    %46 = vector.broadcast %c64_i32 : i32 to vector<8x64xi32>
    %47 = arith.select %45, %23, %46 : vector<8x64xi1>, vector<8x64xi32>
    %cst_19 = arith.constant dense<2147483647> : vector<8xi32>
    %48 = vector.multi_reduction <minsi>, %47, %cst_19 [1] : vector<8x64xi32> to vector<8xi32>
    %49 = vector.shape_cast %48 : vector<8xi32> to vector<8x1xi32>
    %c1_i32_20 = arith.constant 1 : i32
    %50 = vector.broadcast %c1_i32_20 : i32 to vector<8x1xi32>
    %51 = arith.subi %49, %50 : vector<8x1xi32>
    %52 = arith.sitofp %51 : vector<8x1xi32> to vector<8x1xf32>
    %cst_21 = arith.constant 0.000000e+00 : f32
    %53 = vector.broadcast %cst_21 : f32 to vector<8x1xf32>
    %54 = arith.subf %53, %42 : vector<8x1xf32>
    %cst_22 = arith.constant 1.000000e+00 : f32
    %55 = vector.broadcast %cst_22 : f32 to vector<8x1xf32>
    %56 = arith.divf %55, %41 : vector<8x1xf32>
    %57 = vector.broadcast %56 : vector<8x1xf32> to vector<8x64xf32>
    %58 = arith.mulf %39, %57 : vector<8x64xf32>
    %59 = vector.broadcast %32 : vector<8x1xf32> to vector<8x64xf32>
    %60 = arith.subf %20, %59 : vector<8x64xf32>
    %61 = vector.broadcast %42 : vector<8x1xf32> to vector<8x64xf32>
    %62 = arith.subf %60, %61 : vector<8x64xf32>
    %63 = arith.mulf %58, %62 : vector<8x64xf32>
    %cst_23 = arith.constant 0.000000e+00 : f32
    %64 = vector.broadcast %cst_23 : f32 to vector<8x64xf32>
    %65 = arith.select %28, %63, %64 : vector<8x64xi1>, vector<8x64xf32>
    %cst_24 = arith.constant dense<0.000000e+00> : vector<8xf32>
    %66 = vector.multi_reduction <add>, %65, %cst_24 [1] : vector<8x64xf32> to vector<8xf32>
    %67 = vector.shape_cast %66 : vector<8xf32> to vector<8x1xf32>
    %cst_25 = arith.constant 0.000000e+00 : f32
    %68 = vector.broadcast %cst_25 : f32 to vector<8x1xf32>
    %69 = arith.subf %68, %67 : vector<8x1xf32>
    %70 = tpu.iota {dimensions = array<i32: 1>} : vector<8x128xi32>
    %c0_i32 = arith.constant 0 : i32
    %71 = vector.broadcast %c0_i32 : i32 to vector<8x128xi32>
    %72 = arith.cmpi eq, %70, %71 : vector<8x128xi32>
    %cst_26 = arith.constant 0.000000e+00 : f32
    %73 = vector.shape_cast %52 : vector<8x1xf32> to vector<8x1xf32>
    %74 = vector.broadcast %73 : vector<8x1xf32> to vector<8x128xf32>
    %75 = vector.broadcast %cst_26 : f32 to vector<8x128xf32>
    %76 = arith.select %72, %74, %75 : vector<8x128xi1>, vector<8x128xf32>
    %c1_i32_27 = arith.constant 1 : i32
    %77 = vector.broadcast %c1_i32_27 : i32 to vector<8x128xi32>
    %78 = arith.cmpi eq, %70, %77 : vector<8x128xi32>
    %cst_28 = arith.constant 0.000000e+00 : f32
    %79 = vector.shape_cast %54 : vector<8x1xf32> to vector<8x1xf32>
    %80 = vector.broadcast %79 : vector<8x1xf32> to vector<8x128xf32>
    %81 = vector.broadcast %cst_28 : f32 to vector<8x128xf32>
    %82 = arith.select %78, %80, %81 : vector<8x128xi1>, vector<8x128xf32>
    %83 = arith.addf %76, %82 : vector<8x128xf32>
    %c2_i32 = arith.constant 2 : i32
    %84 = vector.broadcast %c2_i32 : i32 to vector<8x128xi32>
    %85 = arith.cmpi eq, %70, %84 : vector<8x128xi32>
    %cst_29 = arith.constant 0.000000e+00 : f32
    %86 = vector.shape_cast %69 : vector<8x1xf32> to vector<8x1xf32>
    %87 = vector.broadcast %86 : vector<8x1xf32> to vector<8x128xf32>
    %88 = vector.broadcast %cst_29 : f32 to vector<8x128xf32>
    %89 = arith.select %85, %87, %88 : vector<8x128xi1>, vector<8x128xf32>
    %90 = arith.addf %83, %89 : vector<8x128xf32>
    %c0_30 = arith.constant 0 : index
    %c0_31 = arith.constant 0 : index
    %91 = vector.load %arg5[%c0_30, %c0_31] : memref<8x128xf32, #tpu.memory_space<vmem>>, vector<8x128xf32>
    tpu.vector_store %arg5[%c0_30, %c0_31], %90 {strides = array<i32>} : memref<8x128xf32, #tpu.memory_space<vmem>>, vector<8x128xf32>,
    return
  }
  func.func @transform_0(%arg0: i32) -> (i32, i32) {
    %c0_i32 = arith.constant 0 : i32
    %c0_i32_0 = arith.constant 0 : i32
    return %arg0, %c0_i32 : i32, i32
  }
  func.func @transform_1(%arg0: i32) -> (i32, i32) {
    %c0_i32 = arith.constant 0 : i32
    %c0_i32_0 = arith.constant 0 : i32
    %c0_i32_1 = arith.constant 0 : i32
    return %c0_i32, %c0_i32_0 : i32, i32
  }
  func.func @transform_2(%arg0: i32) -> (i32, i32) {
    %c0_i32 = arith.constant 0 : i32
    %c0_i32_0 = arith.constant 0 : i32
    %c0_i32_1 = arith.constant 0 : i32
    return %c0_i32, %c0_i32_0 : i32, i32
  }
  func.func @transform_3(%arg0: i32) -> (i32, i32) {
    %c0_i32 = arith.constant 0 : i32
    %c0_i32_0 = arith.constant 0 : i32
    return %arg0, %c0_i32 : i32, i32
  }
  func.func @transform_4(%arg0: i32) -> (i32, i32) {
    %c0_i32 = arith.constant 0 : i32
    %c0_i32_0 = arith.constant 0 : i32
    return %arg0, %c0_i32 : i32, i32
  }
}

</mosaic_0001>

<llo_original>
// kernel: ops_policy_act.1
$region0: #{ops_policy_act.1}
  #allocation0 [shape = 'u32[]', space=smem, size = 0x4, offset = 0x4, fixed_abs, tag = 'smem constant byte address 0x4 - core index']
  #allocation1 [shape = 'u32[144,128]{1,0:T(1,128)}', space=vmem, size = 0x12000, scoped, tag = 'internal scratch']
  %s0 = inlined_call_operand.vmem [shape: f32[8,16], index: 0, kind: input, shape index: {}]
  %s1 = inlined_call_operand.vmem [shape: bf16[144,64], index: 1, kind: input, shape index: {}]
  %s2 = inlined_call_operand.vmem [shape: f32[3,64], index: 2, kind: input, shape index: {}]
  %s3 = inlined_call_operand.vmem [shape: f32[8,128], index: 3, kind: output, shape index: {0}]
  %s4 = inlined_call_operand.vmem [shape: f32[8,128], index: 4, kind: output, shape index: {1}]
  %5 = xla_tuple %s3, %s4
  %s6 = sld [smem:[#allocation0]]
  $region30: #{ops_policy_act.1} parent=0
    _
  %s8 = ssub.s32 1, %s6
  %s9 = scalar_select 0, %s8, %s6
  // Predicated region
  $region2: #{ops_policy_act.1} parent=0 // pred_check
    _
  $region3: #{ops_policy_act.1} parent=0 // pred_check_branch
    %11 = sbr.rel (0) target = $region5
  $region4: #{ops_policy_act.1} parent=0 // pred_region
    _
  $region5: #{ops_policy_act.1} parent=0 // pred_fallthru
    _
  // Predicated region
  $region6: #{ops_policy_act.1} parent=0 // pred_check
    _
  $region7: #{ops_policy_act.1} parent=0 // pred_check_branch
    %13 = sbr.rel (0) target = $region9
  $region8: #{ops_policy_act.1} parent=0 // pred_region
    _
  $region9: #{ops_policy_act.1} parent=0 // pred_fallthru
    _
  // Predicated region
  $region10: #{ops_policy_act.1} parent=0 // pred_check
    _
  $region11: #{ops_policy_act.1} parent=0 // pred_check_branch
    %15 = sbr.rel (0) target = $region13
  $region12: #{ops_policy_act.1} parent=0 // pred_region
    _
  $region13: #{ops_policy_act.1} parent=0 // pred_fallthru
    _
  %v17 = vld [vmem:[%s0] sm:$0xff]
  %v18 = vpack.c.bf16 %v17, %v17
  %v19 = vld [vmem:[%s1] sm:$0xf]
  %v20 = vld [vmem:[%s1 + $0x4] sm:$0xf]
  %v21 = vld [vmem:[%s2] sm:$0x1]
  %v22 = vlaneseq
  %v23 = vshrl.u32 %v22, 7
  %v24 = vsub.s32 0, %v23
  %v25 = vrot.slane %v21, %v24
  %v28 = vunpack.c.l.b16 %v19
  %v29 = vunpack.c.l.b16 %v20
  %v30 = vpack.c.b16 %v29, %v28
  %vm32 = vcmask 130048
  %v34 = vsel %vm32, %v18, 0
  %36 = vmatprep.subr.bf16.mxu0 0
  %37 = vmatpush1.bf16.msra.mxu0 %v30
  %38 = vmatprep.subr.bf16.mxu0 0
  %39 = vmatpush1.bf16.msra.mxu0 0
  %40 = vmatprep.subr.bf16.mxu0 0
  %41 = vmatpush1.bf16.msra.mxu0 0
  %42 = vmatprep.subr.bf16.mxu0 0
  %43 = vmatpush1.bf16.msra.mxu0 0
  %44 = vmatprep.subr.bf16.mxu0 0
  %45 = vmatpush1.bf16.msra.mxu0 0
  %46 = vmatprep.subr.bf16.mxu0 0
  %47 = vmatpush1.bf16.msra.mxu0 0
  %48 = vmatprep.subr.bf16.mxu0 0
  %49 = vmatpush1.bf16.msra.mxu0 0
  %50 = vmatprep.subr.bf16.mxu0 0
  %51 = vmatpush1.bf16.msra.mxu0 0
  %52 = vmatprep.subr.bf16.mxu0 0
  %53 = vmatpush1.bf16.msra.mxu0 0
  %54 = vmatprep.subr.bf16.mxu0 0
  %55 = vmatpush1.bf16.msra.mxu0 0
  %56 = vmatprep.subr.bf16.mxu0 0
  %57 = vmatpush1.bf16.msra.mxu0 0
  %58 = vmatprep.subr.bf16.mxu0 0
  %59 = vmatpush1.bf16.msra.mxu0 0
  %60 = vmatprep.subr.bf16.mxu0 0
  %61 = vmatpush1.bf16.msra.mxu0 0
  %62 = vmatprep.subr.bf16.mxu0 0
  %63 = vmatpush1.bf16.msra.mxu0 0
  %64 = vmatprep.subr.bf16.mxu0 0
  %65 = vmatpush1.bf16.msra.mxu0 0
  %66 = vmatprep.subr.bf16.mxu0 0
  %67 = vmatpush1.bf16.msra.mxu0 0
  %68 = vmatprep.mubr.bf16.mxu0 0
  %69 = vmatmul.mubr.bf16.gmra.mrb[0].mxu0 %v34
  %v70 = vpop.f32.mrb[0].mxu0
  %v71 = vadd.f32 %v25, %v70
  %v72 = vpop.f32.mrb[0].mxu0
  %v73 = vpop.f32.mrb[0].mxu0
  %v74 = vpop.f32.mrb[0].mxu0
  %75 = vdwg.mxu0
  %v76 = vtanh.pop %v71
  %v77 = vpack.c.bf16 %v76, %v76
  %v78 = vld [vmem:[%s1 + $0x8] sm:$0xf]
  %v79 = vld [vmem:[%s1 + $0xc] sm:$0xf]
  %v80 = vld [vmem:[%s1 + $0x10] sm:$0xf]
  %v81 = vld [vmem:[%s1 + $0x14] sm:$0xf]
  %v82 = vld [vmem:[%s1 + $0x18] sm:$0xf]
  %v83 = vld [vmem:[%s1 + $0x1c] sm:$0xf]
  %v84 = vld [vmem:[%s1 + $0x20] sm:$0xf]
  %v85 = vld [vmem:[%s1 + $0x24] sm:$0xf]
  %v86 = vld [vmem:[%s2 + $0x1] sm:$0x1]
  %v87 = vlaneseq
  %v88 = vshrl.u32 %v87, 7
  %v89 = vsub.s32 0, %v88
  %v90 = vrot.slane %v86, %v89
  %v99 = vunpack.c.l.b16 %v78
  %v100 = vunpack.c.l.b16 %v79
  %v101 = vunpack.c.l.b16 %v80
  %v102 = vunpack.c.l.b16 %v81
  %v103 = vunpack.c.l.b16 %v82
  %v104 = vunpack.c.l.b16 %v83
  %v105 = vunpack.c.l.b16 %v84
  %v106 = vunpack.c.l.b16 %v85
  %v107 = vpack.c.b16 %v100, %v99
  %v108 = vpack.c.b16 %v102, %v101
  %v109 = vpack.c.b16 %v104, %v103
  %v110 = vpack.c.b16 %v106, %v105
  %vm115 = vcmask 523264
  %v117 = vsel %vm115, %v77, 0
  %119 = vmatprep.subr.bf16.mxu0 0
  %120 = vmatpush1.bf16.msra.mxu0 %v107
  %121 = vmatprep.subr.bf16.mxu0 0
  %122 = vmatpush1.bf16.msra.mxu0 %v108
  %123 = vmatprep.subr.bf16.mxu0 0
  %124 = vmatpush1.bf16.msra.mxu0 %v109
  %125 = vmatprep.subr.bf16.mxu0 0
  %126 = vmatpush1.bf16.msra.mxu0 %v110
  %127 = vmatprep.subr.bf16.mxu0 0
  %128 = vmatpush1.bf16.msra.mxu0 0
  %129 = vmatprep.subr.bf16.mxu0 0
  %130 = vmatpush1.bf16.msra.mxu0 0
  %131 = vmatprep.subr.bf16.mxu0 0
  %132 = vmatpush1.bf16.msra.mxu0 0
  %133 = vmatprep.subr.bf16.mxu0 0
  %134 = vmatpush1.bf16.msra.mxu0 0
  %135 = vmatprep.subr.bf16.mxu0 0
  %136 = vmatpush1.bf16.msra.mxu0 0
  %137 = vmatprep.subr.bf16.mxu0 0
  %138 = vmatpush1.bf16.msra.mxu0 0
  %139 = vmatprep.subr.bf16.mxu0 0
  %140 = vmatpush1.bf16.msra.mxu0 0
  %141 = vmatprep.subr.bf16.mxu0 0
  %142 = vmatpush1.bf16.msra.mxu0 0
  %143 = vmatprep.subr.bf16.mxu0 0
  %144 = vmatpush1.bf16.msra.mxu0 0
  %145 = vmatprep.subr.bf16.mxu0 0
  %146 = vmatpush1.bf16.msra.mxu0 0
  %147 = vmatprep.subr.bf16.mxu0 0
  %148 = vmatpush1.bf16.msra.mxu0 0
  %149 = vmatprep.subr.bf16.mxu0 0
  %150 = vmatpush1.bf16.msra.mxu0 0
  %151 = vmatprep.mubr.bf16.mxu0 0
  %152 = vmatmul.mubr.bf16.gmra.mrb[0].mxu0 %v117
  %v153 = vpop.f32.mrb[0].mxu0
  %v154 = vadd.f32 %v90, %v153
  %v155 = vpop.f32.mrb[0].mxu0
  %v156 = vpop.f32.mrb[0].mxu0
  %v157 = vpop.f32.mrb[0].mxu0
  %158 = vdwg.mxu0
  %v159 = vtanh.pop %v154
  %v160 = vpack.c.bf16 %v159, %v159
  %v161 = vld [vmem:[%s1 + $0x28] sm:$0xf]
  %v162 = vld [vmem:[%s1 + $0x2c] sm:$0xf]
  %v163 = vld [vmem:[%s1 + $0x30] sm:$0xf]
  %v164 = vld [vmem:[%s1 + $0x34] sm:$0xf]
  %v165 = vld [vmem:[%s1 + $0x38] sm:$0xf]
  %v166 = vld [vmem:[%s1 + $0x3c] sm:$0xf]
  %v167 = vld [vmem:[%s1 + $0x40] sm:$0xf]
  %v168 = vld [vmem:[%s1 + $0x44] sm:$0xf]
  %v169 = vld [vmem:[%s2 + $0x2] sm:$0x1]
  %v170 = vlaneseq
  %v171 = vshrl.u32 %v170, 7
  %v172 = vsub.s32 0, %v171
  %v173 = vrot.slane %v169, %v172
  %v182 = vunpack.c.l.b16 %v161
  %v183 = vunpack.c.l.b16 %v162
  %v184 = vunpack.c.l.b16 %v163
  %v185 = vunpack.c.l.b16 %v164
  %v186 = vunpack.c.l.b16 %v165
  %v187 = vunpack.c.l.b16 %v166
  %v188 = vunpack.c.l.b16 %v167
  %v189 = vunpack.c.l.b16 %v168
  %v190 = vpack.c.b16 %v183, %v182
  %v191 = vpack.c.b16 %v185, %v184
  %v192 = vpack.c.b16 %v187, %v186
  %v193 = vpack.c.b16 %v189, %v188
  %v199 = vsel %vm115, %v160, 0
  %201 = vmatprep.subr.bf16.mxu0 0
  %202 = vmatpush1.bf16.msra.mxu0 %v190
  %203 = vmatprep.subr.bf16.mxu0 0
  %204 = vmatpush1.bf16.msra.mxu0 %v191
  %205 = vmatprep.subr.bf16.mxu0 0
  %206 = vmatpush1.bf16.msra.mxu0 %v192
  %207 = vmatprep.subr.bf16.mxu0 0
  %208 = vmatpush1.bf16.msra.mxu0 %v193
  %209 = vmatprep.subr.bf16.mxu0 0
  %210 = vmatpush1.bf16.msra.mxu0 0
  %211 = vmatprep.subr.bf16.mxu0 0
  %212 = vmatpush1.bf16.msra.mxu0 0
  %213 = vmatprep.subr.bf16.mxu0 0
  %214 = vmatpush1.bf16.msra.mxu0 0
  %215 = vmatprep.subr.bf16.mxu0 0
  %216 = vmatpush1.bf16.msra.mxu0 0
  %217 = vmatprep.subr.bf16.mxu0 0
  %218 = vmatpush1.bf16.msra.mxu0 0
  %219 = vmatprep.subr.bf16.mxu0 0
  %220 = vmatpush1.bf16.msra.mxu0 0
  %221 = vmatprep.subr.bf16.mxu0 0
  %222 = vmatpush1.bf16.msra.mxu0 0
  %223 = vmatprep.subr.bf16.mxu0 0
  %224 = vmatpush1.bf16.msra.mxu0 0
  %225 = vmatprep.subr.bf16.mxu0 0
  %226 = vmatpush1.bf16.msra.mxu0 0
  %227 = vmatprep.subr.bf16.mxu0 0
  %228 = vmatpush1.bf16.msra.mxu0 0
  %229 = vmatprep.subr.bf16.mxu0 0
  %230 = vmatpush1.bf16.msra.mxu0 0
  %231 = vmatprep.subr.bf16.mxu0 0
  %232 = vmatpush1.bf16.msra.mxu0 0
  %233 = vmatprep.mubr.bf16.mxu0 0
  %234 = vmatmul.mubr.bf16.gmra.mrb[0].mxu0 %v199
  %v235 = vpop.f32.mrb[0].mxu0
  %v236 = vadd.f32 %v173, %v235
  %v237 = vpop.f32.mrb[0].mxu0
  %v238 = vpop.f32.mrb[0].mxu0
  %v239 = vpop.f32.mrb[0].mxu0
  %240 = vdwg.mxu0
  %241 = vst.msk [vmem:[%s3] sm:$0xff] %vm115, %v159
  %243 = vrot.lane.b32.xlu0 %v236, 64
  %v244 = vpop.permute.xlu0 %243
  %vm246 = vcmask 1048064
  %247 = vst.msk [vmem:[%s3] sm:$0xff] %vm246, %v244
  %v248 = vlaneseq
  %v249 = vand.u32 %v248, 127
  %vm250 = vcmp.ge.s32.totalorder %v249, 1
  %vm251 = vcmp.lt.s32.totalorder %v249, 7
  %vm252 = vmand %vm250, %vm251
  %v253 = vsel %vm252, %v236, -1e+30
  %v254 = vsel %vm115, %v253, -inf
  %255 = vmax.xlane.f32.xlu0 %v254
  %v256 = vpop.xlane.xlu0 %255
  %v257 = vsub.f32 %v236, %v256
  %v258 = vsel %vm252, %v257, -30.0
  %v259 = vmul.f32 %v258, 1.442695
  %v260 = vpow.pop %v259
  %v261 = vsel %vm252, %v260, 0.0
  %v262 = vsel %vm115, %v261, 0.0
  %263 = vadd.xlane.f32.xlu0 %v262
  %v264 = vpop.xlane.xlu0 %263
  %v265 = vlog2.pop %v264
  %v266 = vmul.f32 %v265, 0.6931472
  %vm267 = vcmp.eq.f32.partialorder %v253, %v256
  %vm268 = vmand %vm252, %vm267
  %v269 = vsel %vm268, %v249, 64
  %v270 = vsel %vm115, %v269, 2147483647
  %v271 = vand.u32 %v270, 65535
  %v272 = vshra.s32 %v270, 16
  %v273 = vcvt.s32.f32 %v271
  %v274 = vcvt.s32.f32 %v272
  %275 = vmin.xlane.f32.xlu0 %v274
  %v276 = vpop.xlane.xlu0 %275
  %vm277 = vcmp.eq.f32.partialorder %v274, %v276
  %v278 = vsel %vm277, %v273, inf
  %279 = vmin.xlane.f32.xlu0 %v278
  %v280 = vpop.xlane.xlu0 %279
  %v281 = vcvt.f32.s32 %v280
  %v282 = vcvt.f32.s32 %v276
  %v283 = vshll.u32 %v282, 16
  %v284 = vadd.s32 %v283, %v281
  %v285 = vsub.s32 %v284, 1
  %v286 = vcvt.s32.f32 %v285
  %v287 = vsub.f32 0.0, %v266
  %v288 = vrcp.pop %v264
  %v289 = vmul.f32 1.0, %v288
  %v290 = vmul.f32 %v261, %v289
  %v291 = vsub.f32 %v257, %v266
  %v292 = vmul.f32 %v290, %v291
  %v293 = vsel %vm252, %v292, 0.0
  %v294 = vsel %vm115, %v293, 0.0
  %295 = vadd.xlane.f32.xlu0 %v294
  %v296 = vpop.xlane.xlu0 %295
  %v297 = vsub.f32 0.0, %v296
  %vm298 = vcmp.eq.s32.totalorder %v249, 0
  %v299 = vsel %vm298, %v286, 0.0
  %vm300 = vcmp.eq.s32.totalorder %v249, 1
  %v301 = vsel %vm300, %v287, 0.0
  %v302 = vadd.f32 %v299, %v301
  %vm303 = vcmp.eq.s32.totalorder %v249, 2
  %v304 = vsel %vm303, %v297, 0.0
  %v305 = vadd.f32 %v302, %v304
  %306 = vst [vmem:[%s4] sm:$0xff] %v305
  // Predicated region
  $region14: #{ops_policy_act.1} parent=0 // pred_check
    _
  $region15: #{ops_policy_act.1} parent=0 // pred_check_branch
    %308 = sbr.rel (0) target = $region17
  $region16: #{ops_policy_act.1} parent=0 // pred_region
    _
  $region17: #{ops_policy_act.1} parent=0 // pred_fallthru
    _
  // Predicated region
  $region18: #{ops_policy_act.1} parent=0 // pred_check
    _
  $region19: #{ops_policy_act.1} parent=0 // pred_check_branch
    %310 = sbr.rel (0) target = $region21
  $region20: #{ops_policy_act.1} parent=0 // pred_region
    _
  $region21: #{ops_policy_act.1} parent=0 // pred_fallthru
    _
  // Predicated region
  $region22: #{ops_policy_act.1} parent=0 // pred_check
    _
  $region23: #{ops_policy_act.1} parent=0 // pred_check_branch
    %312 = sbr.rel (0) target = $region25
  $region24: #{ops_policy_act.1} parent=0 // pred_region
    _
  $region25: #{ops_policy_act.1} parent=0 // pred_fallthru
    _
  // Predicated region
  $region26: #{ops_policy_act.1} parent=0 // pred_check
    _
  $region27: #{ops_policy_act.1} parent=0 // pred_check_branch
    %314 = sbr.rel (0) target = $region29
  $region28: #{ops_policy_act.1} parent=0 // pred_region
    _
  $region29: #{ops_policy_act.1} parent=0 // pred_fallthru
    _

</llo_original>
